<compile_context>
chip_gen: v7x
topology: tpu7x:2x2x1
jax: 0.10.0
libtpu: 0.0.40
codegen_flags: <defaults>
</compile_context>

<pallas_src>
import jax
import jax.numpy as jnp
from jax.experimental import pallas as pl
from jax.experimental.pallas import tpu as pltpu


# ----------------------------- config (stand-in for `args`) -----------------
class Args:
    user = 96
    item = 160
    latdim = 128
    gnn_layer = 2
    concat = 1          # concat last two propagation layers along feature dim
    symetric = True
    ini_embed = "uniform"


args = Args()


# ----------------------------- fused GCN propagation kernel ------------------
def _gcn_fused_kernel(adj_ref, e0_ref, out_ref):
    """All gnn_layer propagations + concat of the last two layers, fused.

    adj_ref : (N, N)  f32 in VMEM (DMA'd once, reused across layers)
    e0_ref  : (N, D)  f32 in VMEM
    out_ref : (N, 2D) f32 in VMEM  -> [e_{L-1} | e_L]
    """
    d = e0_ref.shape[1]
    n_layers = args.gnn_layer  # small compile-time constant -> static unroll

    adj = adj_ref[...]
    prev = e0_ref[...]
    for layer in range(n_layers):
        nxt = jnp.dot(adj, prev, preferred_element_type=jnp.float32)
        if layer < n_layers - 1:
            prev = nxt
        else:
            # second-to-last layer output -> left half, last layer -> right half
            out_ref[:, :d] = prev.astype(out_ref.dtype)
            out_ref[:, d:] = nxt.astype(out_ref.dtype)


@jax.jit
def gcn_propagate_concat(adj, ini_embeds):
    """Returns (N, 2*D) = concat([embeds_{L-1}, embeds_L], axis=-1)."""
    n, d = ini_embeds.shape
    assert adj.shape == (n, n)
    assert args.gnn_layer >= 1

    return pl.pallas_call(
        _gcn_fused_kernel,
        out_shape=jax.ShapeDtypeStruct((n, 2 * d), jnp.float32),
        # Whole arrays resident in VMEM, single kernel invocation (no grid).
        in_specs=[
            pl.BlockSpec(memory_space=pltpu.MemorySpace.VMEM),  # adj
            pl.BlockSpec(memory_space=pltpu.MemorySpace.VMEM),  # ini_embeds
        ],
        out_specs=pl.BlockSpec(memory_space=pltpu.MemorySpace.VMEM),
    )(adj, ini_embeds)


# ----------------------------- parameter / adjacency setup -------------------
def xavier_uniform(key, shape, dtype=jnp.float32):
    """nn.init.xavier_uniform_ for a 2-D tensor (gain=1)."""
    fan_out, fan_in = shape[0], shape[1]
    bound = jnp.sqrt(6.0 / (fan_in + fan_out))
    return jax.random.uniform(key, shape, dtype=dtype, minval=-bound, maxval=bound)


def make_normalized_bi_adj(key, n_user, n_item, dtype=jnp.float32):
    """Dense symmetric normalized bipartite adjacency D^{-1/2} A D^{-1/2}."""
    # TODO(synk): reference uses torch sparse spmm; adjacency is densified here —
    # at real sizes this should become a block-sparse kernel that skips the zero
    # user-user / item-item quadrants via scalar-prefetched block indices.
    n = n_user + n_item
    r = jax.random.bernoulli(key, p=0.05, shape=(n_user, n_item)).astype(dtype)
    top = jnp.concatenate([jnp.zeros((n_user, n_user), dtype), r], axis=1)
    bot = jnp.concatenate([r.T, jnp.zeros((n_item, n_item), dtype)], axis=1)
    a = jnp.concatenate([top, bot], axis=0)
    deg = jnp.maximum(a.sum(axis=1), 1.0)
    d_inv_sqrt = 1.0 / jnp.sqrt(deg)
    return a * d_inv_sqrt[:, None] * d_inv_sqrt[None, :]


# ----------------------------- UntrainedGCN forward --------------------------
def untrained_gcn_forward(adj, ini_embeds, *, return_split=True):
    """Mirrors UntrainedGCN.forward."""
    d = ini_embeds.shape[1]
    both = gcn_propagate_concat(adj, ini_embeds)   # (N, 2D) = [e_{L-1} | e_L]

    if args.concat == 1:
        tem_embeds = both
        usr_embeds = tem_embeds[: args.user]
        itm_embeds = tem_embeds[args.user:]
    else:
        last = both[:, d:]
        second_last = both[:, :d]
        usr_embeds = last[: args.user]
        itm_src = last if args.symetric else second_last
        itm_embeds = itm_src[args.user:]

    if not return_split:
        return jnp.concatenate([usr_embeds, itm_embeds], axis=0)
    return usr_embeds, itm_embeds


# ----------------------------- main ------------------------------------------
if __name__ == "__main__":
    key = jax.random.PRNGKey(0)
    k_adj, k_emb = jax.random.split(key)

    n_total = args.user + args.item  # 256
    adj = make_normalized_bi_adj(k_adj, args.user, args.item)      # (256, 256)
    ini_embeds = xavier_uniform(k_emb, (n_total, args.latdim))     # (256, 128)

    usr_embeds, itm_embeds = untrained_gcn_forward(adj, ini_embeds)
    usr_embeds = jax.block_until_ready(usr_embeds)
    itm_embeds = jax.block_until_ready(itm_embeds)

    # sanity: compare hot path against plain-JAX reference
    e1 = adj @ ini_embeds
    e2 = adj @ e1
    ref = jnp.concatenate([e1, e2], axis=-1)
    assert usr_embeds.shape == (args.user, 2 * args.latdim)
    assert itm_embeds.shape == (args.item, 2 * args.latdim)
    assert jnp.allclose(usr_embeds, ref[: args.user], atol=1e-4, rtol=1e-4)
    assert jnp.allclose(itm_embeds, ref[args.user:], atol=1e-4, rtol=1e-4)

    print("KERNEL_OK")
</pallas_src>

<mosaic_0001>
module attributes {stable_mosaic.version = 11 : i64} {
  func.func @_gcn_fused_kernel(%arg0: memref<256x256xf32, #tpu.memory_space<vmem>>, %arg1: memref<256x128xf32, #tpu.memory_space<vmem>>, %arg2: memref<256x256xf32, #tpu.memory_space<vmem>>) attributes {dimension_semantics = [], scalar_prefetch = 0 : i64, scratch_operands = 0 : i64, tpu.core_type = #tpu.core_type<tc>} {
    %c0 = arith.constant 0 : index
    %c0_0 = arith.constant 0 : index
    %0 = vector.load %arg0[%c0, %c0_0] : memref<256x256xf32, #tpu.memory_space<vmem>>, vector<256x256xf32>
    %c0_1 = arith.constant 0 : index
    %c0_2 = arith.constant 0 : index
    %1 = vector.load %arg1[%c0_1, %c0_2] : memref<256x128xf32, #tpu.memory_space<vmem>>, vector<256x128xf32>
    %cst = arith.constant dense<0.000000e+00> : vector<256x128xf32>
    %2 = tpu.matmul %0, %1, %cst {dimension_numbers = #tpu.dot_dimension_numbers<[1], [0], [0], [1], [0, 0, 1, 1], [], []>} : vector<256x256xf32>, vector<256x128xf32>, vector<256x128xf32> -> vector<256x128xf32>
    %cst_3 = arith.constant dense<0.000000e+00> : vector<256x128xf32>
    %3 = tpu.matmul %0, %2, %cst_3 {dimension_numbers = #tpu.dot_dimension_numbers<[1], [0], [0], [1], [0, 0, 1, 1], [], []>} : vector<256x256xf32>, vector<256x128xf32>, vector<256x128xf32> -> vector<256x128xf32>
    %c0_4 = arith.constant 0 : index
    %c0_5 = arith.constant 0 : index
    %4 = vector.load %arg2[%c0_4, %c0_5] : memref<256x256xf32, #tpu.memory_space<vmem>>, vector<256x128xf32>
    tpu.vector_store %arg2[%c0_4, %c0_5], %2 {strides = array<i32>} : memref<256x256xf32, #tpu.memory_space<vmem>>, vector<256x128xf32>,
    %c0_6 = arith.constant 0 : index
    %c128 = arith.constant 128 : index
    %5 = vector.load %arg2[%c0_6, %c128] : memref<256x256xf32, #tpu.memory_space<vmem>>, vector<256x128xf32>
    tpu.vector_store %arg2[%c0_6, %c128], %3 {strides = array<i32>} : memref<256x256xf32, #tpu.memory_space<vmem>>, vector<256x128xf32>,
    return
  }
}

</mosaic_0001>

<llo_original>
// kernel: gcn_propagate_concat.1
$region0: #{gcn_propagate_concat.1}
  #allocation0 [shape = 'u32[]', space=smem, size = 0x4, offset = 0x4, fixed_abs, tag = 'smem constant byte address 0x4 - core index']
  #allocation1 [shape = 'u32[144,128]{1,0:T(1,128)}', space=vmem, size = 0x12000, scoped, tag = 'internal scratch']
  %s0 = inlined_call_operand.hbm [shape: f32[256,256], index: 0, kind: input, shape index: {}]
  %s1 = inlined_call_operand.hbm [shape: f32[256,128], index: 1, kind: input, shape index: {}]
  %s2 = inlined_call_operand.hbm [shape: f32[256,256], index: 2, kind: output, shape index: {}]
  %s3 = sld [smem:[#allocation0]]
  $region26: #{gcn_propagate_concat.1} parent=0
    _
  %s5 = ssub.s32 1, %s3
  %s6 = scalar_select 0, %s5, %s3
  $region1: #{gcn_propagate_concat.1} parent=0
    #allocation2 [shape = 'u8[262144]{0}', space=vmem, size = 0x40000, scoped, tag = 'input window, operand 0, single buffered']
    #allocation3 [shape = 's32[1]{0}', space=sflag, size = 0x4, scoped, tag = 'scoped memory for gcn_propagate_concat.1']
    #allocation4 [shape = 's32[1]{0}', space=sflag, size = 0x4, scoped, tag = 'scoped memory for gcn_propagate_concat.1']
    #allocation5 [shape = 'u8[131072]{0}', space=vmem, size = 0x20000, scoped, tag = 'input window, operand 1, single buffered']
    #allocation6 [shape = 's32[1]{0}', space=sflag, size = 0x4, scoped, tag = 'scoped memory for gcn_propagate_concat.1']
    #allocation7 [shape = 'u8[262144]{0}', space=vmem, size = 0x40000, scoped, tag = 'output window, operand 0, single buffered']
    %7 = vsyncpa [#allocation3], 0
    %8 = vsyncpa [#allocation6], 0
    %9 = vsyncpa [#allocation4], 0
    // Predicated region
    $region2: #{gcn_propagate_concat.1} parent=1 // pred_check
      _
    $region3: #{gcn_propagate_concat.1} parent=1 // pred_check_branch
      %11 = sbr.rel (0) target = $region5
    $region4: #{gcn_propagate_concat.1} parent=1 // pred_region
      %s13 = ssub.s32 8192, 8192
      %14 = vsyncadd [#allocation3], %s13
      %s15 = sshll.u32 [#allocation2], 4
      %s16 = int_to_ptr.vmem [resolvable:$true] %s15
      %21 = dma.hbm_to_vmem [thread:$0]  %s0, 8192, %s16, [#allocation3], 256, 256, 16
    $region5: #{gcn_propagate_concat.1} parent=1 // pred_fallthru
      _
    // Predicated region
    $region6: #{gcn_propagate_concat.1} parent=1 // pred_check
      _
    $region7: #{gcn_propagate_concat.1} parent=1 // pred_check_branch
      %23 = sbr.rel (0) target = $region9
    $region8: #{gcn_propagate_concat.1} parent=1 // pred_region
      %s25 = ssub.s32 4096, 4096
      %26 = vsyncadd [#allocation6], %s25
      %s27 = sshll.u32 [#allocation5], 4
      %s28 = int_to_ptr.vmem [resolvable:$true] %s27
      %33 = dma.hbm_to_vmem [thread:$0]  %s1, 4096, %s28, [#allocation6], 128, 128, 8
    $region9: #{gcn_propagate_concat.1} parent=1 // pred_fallthru
      _
    // Predicated region
    $region10: #{gcn_propagate_concat.1} parent=1 // pred_check
      _
    $region11: #{gcn_propagate_concat.1} parent=1 // pred_check_branch
      %35 = sbr.rel (0) target = $region13
    $region12: #{gcn_propagate_concat.1} parent=1 // pred_region
      %36 = dma.done [#allocation3], 8192
    $region13: #{gcn_propagate_concat.1} parent=1 // pred_fallthru
      _
    // Predicated region
    $region14: #{gcn_propagate_concat.1} parent=1 // pred_check
      _
    $region15: #{gcn_propagate_concat.1} parent=1 // pred_check_branch
      %38 = sbr.rel (0) target = $region17
    $region16: #{gcn_propagate_concat.1} parent=1 // pred_region
      %39 = dma.done [#allocation6], 4096
    $region17: #{gcn_propagate_concat.1} parent=1 // pred_fallthru
      _
    %v40 = vld [vmem:[#allocation2] sm:$0xff]
    %v41 = vld [vmem:[#allocation2 + $0x8] sm:$0xff]
    %v42 = vld [vmem:[#allocation2 + $0x10] sm:$0xff]
    %v43 = vld [vmem:[#allocation2 + $0x18] sm:$0xff]
    %v44 = vld [vmem:[#allocation2 + $0x20] sm:$0xff]
    %v45 = vld [vmem:[#allocation2 + $0x28] sm:$0xff]
    %v46 = vld [vmem:[#allocation2 + $0x30] sm:$0xff]
    %v47 = vld [vmem:[#allocation2 + $0x38] sm:$0xff]
    %v48 = vld [vmem:[#allocation2 + $0x40] sm:$0xff]
    %v49 = vld [vmem:[#allocation2 + $0x48] sm:$0xff]
    %v50 = vld [vmem:[#allocation2 + $0x50] sm:$0xff]
    %v51 = vld [vmem:[#allocation2 + $0x58] sm:$0xff]
    %v52 = vld [vmem:[#allocation2 + $0x60] sm:$0xff]
    %v53 = vld [vmem:[#allocation2 + $0x68] sm:$0xff]
    %v54 = vld [vmem:[#allocation2 + $0x70] sm:$0xff]
    %v55 = vld [vmem:[#allocation2 + $0x78] sm:$0xff]
    %v56 = vld [vmem:[#allocation2 + $0x80] sm:$0xff]
    %v57 = vld [vmem:[#allocation2 + $0x88] sm:$0xff]
    %v58 = vld [vmem:[#allocation2 + $0x90] sm:$0xff]
    %v59 = vld [vmem:[#allocation2 + $0x98] sm:$0xff]
    %v60 = vld [vmem:[#allocation2 + $0xa0] sm:$0xff]
    %v61 = vld [vmem:[#allocation2 + $0xa8] sm:$0xff]
    %v62 = vld [vmem:[#allocation2 + $0xb0] sm:$0xff]
    %v63 = vld [vmem:[#allocation2 + $0xb8] sm:$0xff]
    %v64 = vld [vmem:[#allocation2 + $0xc0] sm:$0xff]
    %v65 = vld [vmem:[#allocation2 + $0xc8] sm:$0xff]
    %v66 = vld [vmem:[#allocation2 + $0xd0] sm:$0xff]
    %v67 = vld [vmem:[#allocation2 + $0xd8] sm:$0xff]
    %v68 = vld [vmem:[#allocation2 + $0xe0] sm:$0xff]
    %v69 = vld [vmem:[#allocation2 + $0xe8] sm:$0xff]
    %v70 = vld [vmem:[#allocation2 + $0xf0] sm:$0xff]
    %v71 = vld [vmem:[#allocation2 + $0xf8] sm:$0xff]
    %v72 = vld [vmem:[#allocation2 + $0x100] sm:$0xff]
    %v73 = vld [vmem:[#allocation2 + $0x108] sm:$0xff]
    %v74 = vld [vmem:[#allocation2 + $0x110] sm:$0xff]
    %v75 = vld [vmem:[#allocation2 + $0x118] sm:$0xff]
    %v76 = vld [vmem:[#allocation2 + $0x120] sm:$0xff]
    %v77 = vld [vmem:[#allocation2 + $0x128] sm:$0xff]
    %v78 = vld [vmem:[#allocation2 + $0x130] sm:$0xff]
    %v79 = vld [vmem:[#allocation2 + $0x138] sm:$0xff]
    %v80 = vld [vmem:[#allocation2 + $0x140] sm:$0xff]
    %v81 = vld [vmem:[#allocation2 + $0x148] sm:$0xff]
    %v82 = vld [vmem:[#allocation2 + $0x150] sm:$0xff]
    %v83 = vld [vmem:[#allocation2 + $0x158] sm:$0xff]
    %v84 = vld [vmem:[#allocation2 + $0x160] sm:$0xff]
    %v85 = vld [vmem:[#allocation2 + $0x168] sm:$0xff]
    %v86 = vld [vmem:[#allocation2 + $0x170] sm:$0xff]
    %v87 = vld [vmem:[#allocation2 + $0x178] sm:$0xff]
    %v88 = vld [vmem:[#allocation2 + $0x180] sm:$0xff]
    %v89 = vld [vmem:[#allocation2 + $0x188] sm:$0xff]
    %v90 = vld [vmem:[#allocation2 + $0x190] sm:$0xff]
    %v91 = vld [vmem:[#allocation2 + $0x198] sm:$0xff]
    %v92 = vld [vmem:[#allocation2 + $0x1a0] sm:$0xff]
    %v93 = vld [vmem:[#allocation2 + $0x1a8] sm:$0xff]
    %v94 = vld [vmem:[#allocation2 + $0x1b0] sm:$0xff]
    %v95 = vld [vmem:[#allocation2 + $0x1b8] sm:$0xff]
    %v96 = vld [vmem:[#allocation2 + $0x1c0] sm:$0xff]
    %v97 = vld [vmem:[#allocation2 + $0x1c8] sm:$0xff]
    %v98 = vld [vmem:[#allocation2 + $0x1d0] sm:$0xff]
    %v99 = vld [vmem:[#allocation2 + $0x1d8] sm:$0xff]
    %v100 = vld [vmem:[#allocation2 + $0x1e0] sm:$0xff]
    %v101 = vld [vmem:[#allocation2 + $0x1e8] sm:$0xff]
    %v102 = vld [vmem:[#allocation2 + $0x1f0] sm:$0xff]
    %v103 = vld [vmem:[#allocation2 + $0x1f8] sm:$0xff]
    %v104 = vld [vmem:[#allocation5] sm:$0xff]
    %v105 = vld [vmem:[#allocation5 + $0x8] sm:$0xff]
    %v106 = vld [vmem:[#allocation5 + $0x10] sm:$0xff]
    %v107 = vld [vmem:[#allocation5 + $0x18] sm:$0xff]
    %v108 = vld [vmem:[#allocation5 + $0x20] sm:$0xff]
    %v109 = vld [vmem:[#allocation5 + $0x28] sm:$0xff]
    %v110 = vld [vmem:[#allocation5 + $0x30] sm:$0xff]
    %v111 = vld [vmem:[#allocation5 + $0x38] sm:$0xff]
    %v112 = vld [vmem:[#allocation5 + $0x40] sm:$0xff]
    %v113 = vld [vmem:[#allocation5 + $0x48] sm:$0xff]
    %v114 = vld [vmem:[#allocation5 + $0x50] sm:$0xff]
    %v115 = vld [vmem:[#allocation5 + $0x58] sm:$0xff]
    %v116 = vld [vmem:[#allocation5 + $0x60] sm:$0xff]
    %v117 = vld [vmem:[#allocation5 + $0x68] sm:$0xff]
    %v118 = vld [vmem:[#allocation5 + $0x70] sm:$0xff]
    %v119 = vld [vmem:[#allocation5 + $0x78] sm:$0xff]
    %v120 = vld [vmem:[#allocation5 + $0x80] sm:$0xff]
    %v121 = vld [vmem:[#allocation5 + $0x88] sm:$0xff]
    %v122 = vld [vmem:[#allocation5 + $0x90] sm:$0xff]
    %v123 = vld [vmem:[#allocation5 + $0x98] sm:$0xff]
    %v124 = vld [vmem:[#allocation5 + $0xa0] sm:$0xff]
    %v125 = vld [vmem:[#allocation5 + $0xa8] sm:$0xff]
    %v126 = vld [vmem:[#allocation5 + $0xb0] sm:$0xff]
    %v127 = vld [vmem:[#allocation5 + $0xb8] sm:$0xff]
    %v128 = vld [vmem:[#allocation5 + $0xc0] sm:$0xff]
    %v129 = vld [vmem:[#allocation5 + $0xc8] sm:$0xff]
    %v130 = vld [vmem:[#allocation5 + $0xd0] sm:$0xff]
    %v131 = vld [vmem:[#allocation5 + $0xd8] sm:$0xff]
    %v132 = vld [vmem:[#allocation5 + $0xe0] sm:$0xff]
    %v133 = vld [vmem:[#allocation5 + $0xe8] sm:$0xff]
    %v134 = vld [vmem:[#allocation5 + $0xf0] sm:$0xff]
    %v135 = vld [vmem:[#allocation5 + $0xf8] sm:$0xff]
    %136 = vmatprep.subr.mxu0 0.0
    %137 = vmatpush1.msra.mxu0 %v104
    %138 = vmatprep.subr.mxu0 0.0
    %139 = vmatpush1.msra.mxu0 %v105
    %140 = vmatprep.subr.mxu0 0.0
    %141 = vmatpush1.msra.mxu0 %v106
    %142 = vmatprep.subr.mxu0 0.0
    %143 = vmatpush1.msra.mxu0 %v107
    %144 = vmatprep.subr.mxu0 0.0
    %145 = vmatpush1.msra.mxu0 %v108
    %146 = vmatprep.subr.mxu0 0.0
    %147 = vmatpush1.msra.mxu0 %v109
    %148 = vmatprep.subr.mxu0 0.0
    %149 = vmatpush1.msra.mxu0 %v110
    %150 = vmatprep.subr.mxu0 0.0
    %151 = vmatpush1.msra.mxu0 %v111
    %152 = vmatprep.subr.mxu0 0.0
    %153 = vmatpush1.msra.mxu0 %v112
    %154 = vmatprep.subr.mxu0 0.0
    %155 = vmatpush1.msra.mxu0 %v113
    %156 = vmatprep.subr.mxu0 0.0
    %157 = vmatpush1.msra.mxu0 %v114
    %158 = vmatprep.subr.mxu0 0.0
    %159 = vmatpush1.msra.mxu0 %v115
    %160 = vmatprep.subr.mxu0 0.0
    %161 = vmatpush1.msra.mxu0 %v116
    %162 = vmatprep.subr.mxu0 0.0
    %163 = vmatpush1.msra.mxu0 %v117
    %164 = vmatprep.subr.mxu0 0.0
    %165 = vmatpush1.msra.mxu0 %v118
    %166 = vmatprep.subr.mxu0 0.0
    %167 = vmatpush1.msra.mxu0 %v119
    %168 = vmatprep.subr.mxu0 0.0
    %169 = vmatpush1.msra.mxu0 %v120
    %170 = vmatprep.subr.mxu0 0.0
    %171 = vmatpush1.msra.mxu0 %v121
    %172 = vmatprep.subr.mxu0 0.0
    %173 = vmatpush1.msra.mxu0 %v122
    %174 = vmatprep.subr.mxu0 0.0
    %175 = vmatpush1.msra.mxu0 %v123
    %176 = vmatprep.subr.mxu0 0.0
    %177 = vmatpush1.msra.mxu0 %v124
    %178 = vmatprep.subr.mxu0 0.0
    %179 = vmatpush1.msra.mxu0 %v125
    %180 = vmatprep.subr.mxu0 0.0
    %181 = vmatpush1.msra.mxu0 %v126
    %182 = vmatprep.subr.mxu0 0.0
    %183 = vmatpush1.msra.mxu0 %v127
    %184 = vmatprep.subr.mxu0 0.0
    %185 = vmatpush1.msra.mxu0 %v128
    %186 = vmatprep.subr.mxu0 0.0
    %187 = vmatpush1.msra.mxu0 %v129
    %188 = vmatprep.subr.mxu0 0.0
    %189 = vmatpush1.msra.mxu0 %v130
    %190 = vmatprep.subr.mxu0 0.0
    %191 = vmatpush1.msra.mxu0 %v131
    %192 = vmatprep.subr.mxu0 0.0
    %193 = vmatpush1.msra.mxu0 %v132
    %194 = vmatprep.subr.mxu0 0.0
    %195 = vmatpush1.msra.mxu0 %v133
    %196 = vmatprep.subr.mxu0 0.0
    %197 = vmatpush1.msra.mxu0 %v134
    %198 = vmatprep.subr.mxu0 0.0
    %199 = vmatpush1.msra.mxu0 %v135
    %200 = vmatprep.mubr.f32.mxu0 %v41
    %201 = vmatmul.mubr.f32.gmra.mrb[0].mxu0 %v40
    %v202 = vpop.f32.mrb[0].mxu0
    %v203 = vadd.f32 0.0, %v202
    %v204 = vpop.f32.mrb[0].mxu0
    %205 = vmatprep.mubr.f32.mxu0 %v43
    %206 = vmatmul.mubr.f32.gmra.mrb[0].mxu0 %v42
    %v207 = vpop.f32.mrb[0].mxu0
    %v208 = vadd.f32 0.0, %v207
    %v209 = vpop.f32.mrb[0].mxu0
    %210 = vmatprep.mubr.f32.mxu0 %v45
    %211 = vmatmul.mubr.f32.gmra.mrb[0].mxu0 %v44
    %v212 = vpop.f32.mrb[0].mxu0
    %v213 = vadd.f32 0.0, %v212
    %v214 = vpop.f32.mrb[0].mxu0
    %215 = vmatprep.mubr.f32.mxu0 %v47
    %216 = vmatmul.mubr.f32.gmra.mrb[0].mxu0 %v46
    %v217 = vpop.f32.mrb[0].mxu0
    %v218 = vadd.f32 0.0, %v217
    %v219 = vpop.f32.mrb[0].mxu0
    %220 = vmatprep.mubr.f32.mxu0 %v49
    %221 = vmatmul.mubr.f32.gmra.mrb[0].mxu0 %v48
    %v222 = vpop.f32.mrb[0].mxu0
    %v223 = vadd.f32 0.0, %v222
    %v224 = vpop.f32.mrb[0].mxu0
    %225 = vmatprep.mubr.f32.mxu0 %v51
    %226 = vmatmul.mubr.f32.gmra.mrb[0].mxu0 %v50
    %v227 = vpop.f32.mrb[0].mxu0
    %v228 = vadd.f32 0.0, %v227
    %v229 = vpop.f32.mrb[0].mxu0
    %230 = vmatprep.mubr.f32.mxu0 %v53
    %231 = vmatmul.mubr.f32.gmra.mrb[0].mxu0 %v52
    %v232 = vpop.f32.mrb[0].mxu0
    %v233 = vadd.f32 0.0, %v232
    %v234 = vpop.f32.mrb[0].mxu0
    %235 = vmatprep.mubr.f32.mxu0 %v55
    %236 = vmatmul.mubr.f32.gmra.mrb[0].mxu0 %v54
    %v237 = vpop.f32.mrb[0].mxu0
    %v238 = vadd.f32 0.0, %v237
    %v239 = vpop.f32.mrb[0].mxu0
    %240 = vmatprep.mubr.f32.mxu0 %v57
    %241 = vmatmul.mubr.f32.gmra.mrb[0].mxu0 %v56
    %v242 = vpop.f32.mrb[0].mxu0
    %v243 = vadd.f32 0.0, %v242
    %v244 = vpop.f32.mrb[0].mxu0
    %245 = vmatprep.mubr.f32.mxu0 %v59
    %246 = vmatmul.mubr.f32.gmra.mrb[0].mxu0 %v58
    %v247 = vpop.f32.mrb[0].mxu0
    %v248 = vadd.f32 0.0, %v247
    %v249 = vpop.f32.mrb[0].mxu0
    %250 = vmatprep.mubr.f32.mxu0 %v61
    %251 = vmatmul.mubr.f32.gmra.mrb[0].mxu0 %v60
    %v252 = vpop.f32.mrb[0].mxu0
    %v253 = vadd.f32 0.0, %v252
    %v254 = vpop.f32.mrb[0].mxu0
    %255 = vmatprep.mubr.f32.mxu0 %v63
    %256 = vmatmul.mubr.f32.gmra.mrb[0].mxu0 %v62
    %v257 = vpop.f32.mrb[0].mxu0
    %v258 = vadd.f32 0.0, %v257
    %v259 = vpop.f32.mrb[0].mxu0
    %260 = vmatprep.mubr.f32.mxu0 %v65
    %261 = vmatmul.mubr.f32.gmra.mrb[0].mxu0 %v64
    %v262 = vpop.f32.mrb[0].mxu0
    %v263 = vadd.f32 0.0, %v262
    %v264 = vpop.f32.mrb[0].mxu0
    %265 = vmatprep.mubr.f32.mxu0 %v67
    %266 = vmatmul.mubr.f32.gmra.mrb[0].mxu0 %v66
    %v267 = vpop.f32.mrb[0].mxu0
    %v268 = vadd.f32 0.0, %v267
    %v269 = vpop.f32.mrb[0].mxu0
    %270 = vmatprep.mubr.f32.mxu0 %v69
    %271 = vmatmul.mubr.f32.gmra.mrb[0].mxu0 %v68
    %v272 = vpop.f32.mrb[0].mxu0
    %v273 = vadd.f32 0.0, %v272
    %v274 = vpop.f32.mrb[0].mxu0
    %275 = vmatprep.mubr.f32.mxu0 %v71
    %276 = vmatmul.mubr.f32.gmra.mrb[0].mxu0 %v70
    %v277 = vpop.f32.mrb[0].mxu0
    %v278 = vadd.f32 0.0, %v277
    %v279 = vpop.f32.mrb[0].mxu0
    %280 = vmatprep.mubr.f32.mxu0 %v73
    %281 = vmatmul.mubr.f32.gmra.mrb[0].mxu0 %v72
    %v282 = vpop.f32.mrb[0].mxu0
    %v283 = vadd.f32 0.0, %v282
    %v284 = vpop.f32.mrb[0].mxu0
    %285 = vmatprep.mubr.f32.mxu0 %v75
    %286 = vmatmul.mubr.f32.gmra.mrb[0].mxu0 %v74
    %v287 = vpop.f32.mrb[0].mxu0
    %v288 = vadd.f32 0.0, %v287
    %v289 = vpop.f32.mrb[0].mxu0
    %290 = vmatprep.mubr.f32.mxu0 %v77
    %291 = vmatmul.mubr.f32.gmra.mrb[0].mxu0 %v76
    %v292 = vpop.f32.mrb[0].mxu0
    %v293 = vadd.f32 0.0, %v292
    %v294 = vpop.f32.mrb[0].mxu0
    %295 = vmatprep.mubr.f32.mxu0 %v79
    %296 = vmatmul.mubr.f32.gmra.mrb[0].mxu0 %v78
    %v297 = vpop.f32.mrb[0].mxu0
    %v298 = vadd.f32 0.0, %v297
    %v299 = vpop.f32.mrb[0].mxu0
    %300 = vmatprep.mubr.f32.mxu0 %v81
    %301 = vmatmul.mubr.f32.gmra.mrb[0].mxu0 %v80
    %v302 = vpop.f32.mrb[0].mxu0
    %v303 = vadd.f32 0.0, %v302
    %v304 = vpop.f32.mrb[0].mxu0
    %305 = vmatprep.mubr.f32.mxu0 %v83
    %306 = vmatmul.mubr.f32.gmra.mrb[0].mxu0 %v82
    %v307 = vpop.f32.mrb[0].mxu0
    %v308 = vadd.f32 0.0, %v307
    %v309 = vpop.f32.mrb[0].mxu0
    %310 = vmatprep.mubr.f32.mxu0 %v85
    %311 = vmatmul.mubr.f32.gmra.mrb[0].mxu0 %v84
    %v312 = vpop.f32.mrb[0].mxu0
    %v313 = vadd.f32 0.0, %v312
    %v314 = vpop.f32.mrb[0].mxu0
    %315 = vmatprep.mubr.f32.mxu0 %v87
    %316 = vmatmul.mubr.f32.gmra.mrb[0].mxu0 %v86
    %v317 = vpop.f32.mrb[0].mxu0
    %v318 = vadd.f32 0.0, %v317
    %v319 = vpop.f32.mrb[0].mxu0
    %320 = vmatprep.mubr.f32.mxu0 %v89
    %321 = vmatmul.mubr.f32.gmra.mrb[0].mxu0 %v88
    %v322 = vpop.f32.mrb[0].mxu0
    %v323 = vadd.f32 0.0, %v322
    %v324 = vpop.f32.mrb[0].mxu0
    %325 = vmatprep.mubr.f32.mxu0 %v91
    %326 = vmatmul.mubr.f32.gmra.mrb[0].mxu0 %v90
    %v327 = vpop.f32.mrb[0].mxu0
    %v328 = vadd.f32 0.0, %v327
    %v329 = vpop.f32.mrb[0].mxu0
    %330 = vmatprep.mubr.f32.mxu0 %v93
    %331 = vmatmul.mubr.f32.gmra.mrb[0].mxu0 %v92
    %v332 = vpop.f32.mrb[0].mxu0
    %v333 = vadd.f32 0.0, %v332
    %v334 = vpop.f32.mrb[0].mxu0
    %335 = vmatprep.mubr.f32.mxu0 %v95
    %336 = vmatmul.mubr.f32.gmra.mrb[0].mxu0 %v94
    %v337 = vpop.f32.mrb[0].mxu0
    %v338 = vadd.f32 0.0, %v337
    %v339 = vpop.f32.mrb[0].mxu0
    %340 = vmatprep.mubr.f32.mxu0 %v97
    %341 = vmatmul.mubr.f32.gmra.mrb[0].mxu0 %v96
    %v342 = vpop.f32.mrb[0].mxu0
    %v343 = vadd.f32 0.0, %v342
    %v344 = vpop.f32.mrb[0].mxu0
    %345 = vmatprep.mubr.f32.mxu0 %v99
    %346 = vmatmul.mubr.f32.gmra.mrb[0].mxu0 %v98
    %v347 = vpop.f32.mrb[0].mxu0
    %v348 = vadd.f32 0.0, %v347
    %v349 = vpop.f32.mrb[0].mxu0
    %350 = vmatprep.mubr.f32.mxu0 %v101
    %351 = vmatmul.mubr.f32.gmra.mrb[0].mxu0 %v100
    %v352 = vpop.f32.mrb[0].mxu0
    %v353 = vadd.f32 0.0, %v352
    %v354 = vpop.f32.mrb[0].mxu0
    %355 = vmatprep.mubr.f32.mxu0 %v103
    %356 = vmatmul.mubr.f32.gmra.mrb[0].mxu0 %v102
    %v357 = vpop.f32.mrb[0].mxu0
    %v358 = vadd.f32 0.0, %v357
    %v359 = vpop.f32.mrb[0].mxu0
    %360 = vdwg.mxu0
    %361 = vmatprep.subr.mxu0 0.0
    %362 = vmatpush1.msra.mxu0 %v203
    %363 = vmatprep.subr.mxu0 0.0
    %364 = vmatpush1.msra.mxu0 %v208
    %365 = vmatprep.subr.mxu0 0.0
    %366 = vmatpush1.msra.mxu0 %v213
    %367 = vmatprep.subr.mxu0 0.0
    %368 = vmatpush1.msra.mxu0 %v218
    %369 = vmatprep.subr.mxu0 0.0
    %370 = vmatpush1.msra.mxu0 %v223
    %371 = vmatprep.subr.mxu0 0.0
    %372 = vmatpush1.msra.mxu0 %v228
    %373 = vmatprep.subr.mxu0 0.0
    %374 = vmatpush1.msra.mxu0 %v233
    %375 = vmatprep.subr.mxu0 0.0
    %376 = vmatpush1.msra.mxu0 %v238
    %377 = vmatprep.subr.mxu0 0.0
    %378 = vmatpush1.msra.mxu0 %v243
    %379 = vmatprep.subr.mxu0 0.0
    %380 = vmatpush1.msra.mxu0 %v248
    %381 = vmatprep.subr.mxu0 0.0
    %382 = vmatpush1.msra.mxu0 %v253
    %383 = vmatprep.subr.mxu0 0.0
    %384 = vmatpush1.msra.mxu0 %v258
    %385 = vmatprep.subr.mxu0 0.0
    %386 = vmatpush1.msra.mxu0 %v263
    %387 = vmatprep.subr.mxu0 0.0
    %388 = vmatpush1.msra.mxu0 %v268
    %389 = vmatprep.subr.mxu0 0.0
    %390 = vmatpush1.msra.mxu0 %v273
    %391 = vmatprep.subr.mxu0 0.0
    %392 = vmatpush1.msra.mxu0 %v278
    %393 = vmatprep.subr.mxu0 0.0
    %394 = vmatpush1.msra.mxu0 %v283
    %395 = vmatprep.subr.mxu0 0.0
    %396 = vmatpush1.msra.mxu0 %v288
    %397 = vmatprep.subr.mxu0 0.0
    %398 = vmatpush1.msra.mxu0 %v293
    %399 = vmatprep.subr.mxu0 0.0
    %400 = vmatpush1.msra.mxu0 %v298
    %401 = vmatprep.subr.mxu0 0.0
    %402 = vmatpush1.msra.mxu0 %v303
    %403 = vmatprep.subr.mxu0 0.0
    %404 = vmatpush1.msra.mxu0 %v308
    %405 = vmatprep.subr.mxu0 0.0
    %406 = vmatpush1.msra.mxu0 %v313
    %407 = vmatprep.subr.mxu0 0.0
    %408 = vmatpush1.msra.mxu0 %v318
    %409 = vmatprep.subr.mxu0 0.0
    %410 = vmatpush1.msra.mxu0 %v323
    %411 = vmatprep.subr.mxu0 0.0
    %412 = vmatpush1.msra.mxu0 %v328
    %413 = vmatprep.subr.mxu0 0.0
    %414 = vmatpush1.msra.mxu0 %v333
    %415 = vmatprep.subr.mxu0 0.0
    %416 = vmatpush1.msra.mxu0 %v338
    %417 = vmatprep.subr.mxu0 0.0
    %418 = vmatpush1.msra.mxu0 %v343
    %419 = vmatprep.subr.mxu0 0.0
    %420 = vmatpush1.msra.mxu0 %v348
    %421 = vmatprep.subr.mxu0 0.0
    %422 = vmatpush1.msra.mxu0 %v353
    %423 = vmatprep.subr.mxu0 0.0
    %424 = vmatpush1.msra.mxu0 %v358
    %425 = vmatprep.mubr.f32.mxu0 %v41
    %426 = vmatmul.mubr.f32.gmra.mrb[0].mxu0 %v40
    %v427 = vpop.f32.mrb[0].mxu0
    %v428 = vadd.f32 0.0, %v427
    %v429 = vpop.f32.mrb[0].mxu0
    %430 = vmatprep.mubr.f32.mxu0 %v43
    %431 = vmatmul.mubr.f32.gmra.mrb[0].mxu0 %v42
    %v432 = vpop.f32.mrb[0].mxu0
    %v433 = vadd.f32 0.0, %v432
    %v434 = vpop.f32.mrb[0].mxu0
    %435 = vmatprep.mubr.f32.mxu0 %v45
    %436 = vmatmul.mubr.f32.gmra.mrb[0].mxu0 %v44
    %v437 = vpop.f32.mrb[0].mxu0
    %v438 = vadd.f32 0.0, %v437
    %v439 = vpop.f32.mrb[0].mxu0
    %440 = vmatprep.mubr.f32.mxu0 %v47
    %441 = vmatmul.mubr.f32.gmra.mrb[0].mxu0 %v46
    %v442 = vpop.f32.mrb[0].mxu0
    %v443 = vadd.f32 0.0, %v442
    %v444 = vpop.f32.mrb[0].mxu0
    %445 = vmatprep.mubr.f32.mxu0 %v49
    %446 = vmatmul.mubr.f32.gmra.mrb[0].mxu0 %v48
    %v447 = vpop.f32.mrb[0].mxu0
    %v448 = vadd.f32 0.0, %v447
    %v449 = vpop.f32.mrb[0].mxu0
    %450 = vmatprep.mubr.f32.mxu0 %v51
    %451 = vmatmul.mubr.f32.gmra.mrb[0].mxu0 %v50
    %v452 = vpop.f32.mrb[0].mxu0
    %v453 = vadd.f32 0.0, %v452
    %v454 = vpop.f32.mrb[0].mxu0
    %455 = vmatprep.mubr.f32.mxu0 %v53
    %456 = vmatmul.mubr.f32.gmra.mrb[0].mxu0 %v52
    %v457 = vpop.f32.mrb[0].mxu0
    %v458 = vadd.f32 0.0, %v457
    %v459 = vpop.f32.mrb[0].mxu0
    %460 = vmatprep.mubr.f32.mxu0 %v55
    %461 = vmatmul.mubr.f32.gmra.mrb[0].mxu0 %v54
    %v462 = vpop.f32.mrb[0].mxu0
    %v463 = vadd.f32 0.0, %v462
    %v464 = vpop.f32.mrb[0].mxu0
    %465 = vmatprep.mubr.f32.mxu0 %v57
    %466 = vmatmul.mubr.f32.gmra.mrb[0].mxu0 %v56
    %v467 = vpop.f32.mrb[0].mxu0
    %v468 = vadd.f32 0.0, %v467
    %v469 = vpop.f32.mrb[0].mxu0
    %470 = vmatprep.mubr.f32.mxu0 %v59
    %471 = vmatmul.mubr.f32.gmra.mrb[0].mxu0 %v58
    %v472 = vpop.f32.mrb[0].mxu0
    %v473 = vadd.f32 0.0, %v472
    %v474 = vpop.f32.mrb[0].mxu0
    %475 = vmatprep.mubr.f32.mxu0 %v61
    %476 = vmatmul.mubr.f32.gmra.mrb[0].mxu0 %v60
    %v477 = vpop.f32.mrb[0].mxu0
    %v478 = vadd.f32 0.0, %v477
    %v479 = vpop.f32.mrb[0].mxu0
    %480 = vmatprep.mubr.f32.mxu0 %v63
    %481 = vmatmul.mubr.f32.gmra.mrb[0].mxu0 %v62
    %v482 = vpop.f32.mrb[0].mxu0
    %v483 = vadd.f32 0.0, %v482
    %v484 = vpop.f32.mrb[0].mxu0
    %485 = vmatprep.mubr.f32.mxu0 %v65
    %486 = vmatmul.mubr.f32.gmra.mrb[0].mxu0 %v64
    %v487 = vpop.f32.mrb[0].mxu0
    %v488 = vadd.f32 0.0, %v487
    %v489 = vpop.f32.mrb[0].mxu0
    %490 = vmatprep.mubr.f32.mxu0 %v67
    %491 = vmatmul.mubr.f32.gmra.mrb[0].mxu0 %v66
    %v492 = vpop.f32.mrb[0].mxu0
    %v493 = vadd.f32 0.0, %v492
    %v494 = vpop.f32.mrb[0].mxu0
    %495 = vmatprep.mubr.f32.mxu0 %v69
    %496 = vmatmul.mubr.f32.gmra.mrb[0].mxu0 %v68
    %v497 = vpop.f32.mrb[0].mxu0
    %v498 = vadd.f32 0.0, %v497
    %v499 = vpop.f32.mrb[0].mxu0
    %500 = vmatprep.mubr.f32.mxu0 %v71
    %501 = vmatmul.mubr.f32.gmra.mrb[0].mxu0 %v70
    %v502 = vpop.f32.mrb[0].mxu0
    %v503 = vadd.f32 0.0, %v502
    %v504 = vpop.f32.mrb[0].mxu0
    %505 = vmatprep.mubr.f32.mxu0 %v73
    %506 = vmatmul.mubr.f32.gmra.mrb[0].mxu0 %v72
    %v507 = vpop.f32.mrb[0].mxu0
    %v508 = vadd.f32 0.0, %v507
    %v509 = vpop.f32.mrb[0].mxu0
    %510 = vmatprep.mubr.f32.mxu0 %v75
    %511 = vmatmul.mubr.f32.gmra.mrb[0].mxu0 %v74
    %v512 = vpop.f32.mrb[0].mxu0
    %v513 = vadd.f32 0.0, %v512
    %v514 = vpop.f32.mrb[0].mxu0
    %515 = vmatprep.mubr.f32.mxu0 %v77
    %516 = vmatmul.mubr.f32.gmra.mrb[0].mxu0 %v76
    %v517 = vpop.f32.mrb[0].mxu0
    %v518 = vadd.f32 0.0, %v517
    %v519 = vpop.f32.mrb[0].mxu0
    %520 = vmatprep.mubr.f32.mxu0 %v79
    %521 = vmatmul.mubr.f32.gmra.mrb[0].mxu0 %v78
    %v522 = vpop.f32.mrb[0].mxu0
    %v523 = vadd.f32 0.0, %v522
    %v524 = vpop.f32.mrb[0].mxu0
    %525 = vmatprep.mubr.f32.mxu0 %v81
    %526 = vmatmul.mubr.f32.gmra.mrb[0].mxu0 %v80
    %v527 = vpop.f32.mrb[0].mxu0
    %v528 = vadd.f32 0.0, %v527
    %v529 = vpop.f32.mrb[0].mxu0
    %530 = vmatprep.mubr.f32.mxu0 %v83
    %531 = vmatmul.mubr.f32.gmra.mrb[0].mxu0 %v82
    %v532 = vpop.f32.mrb[0].mxu0
    %v533 = vadd.f32 0.0, %v532
    %v534 = vpop.f32.mrb[0].mxu0
    %535 = vmatprep.mubr.f32.mxu0 %v85
    %536 = vmatmul.mubr.f32.gmra.mrb[0].mxu0 %v84
    %v537 = vpop.f32.mrb[0].mxu0
    %v538 = vadd.f32 0.0, %v537
    %v539 = vpop.f32.mrb[0].mxu0
    %540 = vmatprep.mubr.f32.mxu0 %v87
    %541 = vmatmul.mubr.f32.gmra.mrb[0].mxu0 %v86
    %v542 = vpop.f32.mrb[0].mxu0
    %v543 = vadd.f32 0.0, %v542
    %v544 = vpop.f32.mrb[0].mxu0
    %545 = vmatprep.mubr.f32.mxu0 %v89
    %546 = vmatmul.mubr.f32.gmra.mrb[0].mxu0 %v88
    %v547 = vpop.f32.mrb[0].mxu0
    %v548 = vadd.f32 0.0, %v547
    %v549 = vpop.f32.mrb[0].mxu0
    %550 = vmatprep.mubr.f32.mxu0 %v91
    %551 = vmatmul.mubr.f32.gmra.mrb[0].mxu0 %v90
    %v552 = vpop.f32.mrb[0].mxu0
    %v553 = vadd.f32 0.0, %v552
    %v554 = vpop.f32.mrb[0].mxu0
    %555 = vmatprep.mubr.f32.mxu0 %v93
    %556 = vmatmul.mubr.f32.gmra.mrb[0].mxu0 %v92
    %v557 = vpop.f32.mrb[0].mxu0
    %v558 = vadd.f32 0.0, %v557
    %v559 = vpop.f32.mrb[0].mxu0
    %560 = vmatprep.mubr.f32.mxu0 %v95
    %561 = vmatmul.mubr.f32.gmra.mrb[0].mxu0 %v94
    %v562 = vpop.f32.mrb[0].mxu0
    %v563 = vadd.f32 0.0, %v562
    %v564 = vpop.f32.mrb[0].mxu0
    %565 = vmatprep.mubr.f32.mxu0 %v97
    %566 = vmatmul.mubr.f32.gmra.mrb[0].mxu0 %v96
    %v567 = vpop.f32.mrb[0].mxu0
    %v568 = vadd.f32 0.0, %v567
    %v569 = vpop.f32.mrb[0].mxu0
    %570 = vmatprep.mubr.f32.mxu0 %v99
    %571 = vmatmul.mubr.f32.gmra.mrb[0].mxu0 %v98
    %v572 = vpop.f32.mrb[0].mxu0
    %v573 = vadd.f32 0.0, %v572
    %v574 = vpop.f32.mrb[0].mxu0
    %575 = vmatprep.mubr.f32.mxu0 %v101
    %576 = vmatmul.mubr.f32.gmra.mrb[0].mxu0 %v100
    %v577 = vpop.f32.mrb[0].mxu0
    %v578 = vadd.f32 0.0, %v577
    %v579 = vpop.f32.mrb[0].mxu0
    %580 = vmatprep.mubr.f32.mxu0 %v103
    %581 = vmatmul.mubr.f32.gmra.mrb[0].mxu0 %v102
    %v582 = vpop.f32.mrb[0].mxu0
    %v583 = vadd.f32 0.0, %v582
    %v584 = vpop.f32.mrb[0].mxu0
    %585 = vdwg.mxu0
    %586 = vst [vmem:[#allocation7] sm:$0xff] %v203
    %587 = vst [vmem:[#allocation7 + $0x10] sm:$0xff] %v208
    %588 = vst [vmem:[#allocation7 + $0x20] sm:$0xff] %v213
    %589 = vst [vmem:[#allocation7 + $0x30] sm:$0xff] %v218
    %590 = vst [vmem:[#allocation7 + $0x40] sm:$0xff] %v223
    %591 = vst [vmem:[#allocation7 + $0x50] sm:$0xff] %v228
    %592 = vst [vmem:[#allocation7 + $0x60] sm:$0xff] %v233
    %593 = vst [vmem:[#allocation7 + $0x70] sm:$0xff] %v238
    %594 = vst [vmem:[#allocation7 + $0x80] sm:$0xff] %v243
    %595 = vst [vmem:[#allocation7 + $0x90] sm:$0xff] %v248
    %596 = vst [vmem:[#allocation7 + $0xa0] sm:$0xff] %v253
    %597 = vst [vmem:[#allocation7 + $0xb0] sm:$0xff] %v258
    %598 = vst [vmem:[#allocation7 + $0xc0] sm:$0xff] %v263
    %599 = vst [vmem:[#allocation7 + $0xd0] sm:$0xff] %v268
    %600 = vst [vmem:[#allocation7 + $0xe0] sm:$0xff] %v273
    %601 = vst [vmem:[#allocation7 + $0xf0] sm:$0xff] %v278
    %602 = vst [vmem:[#allocation7 + $0x100] sm:$0xff] %v283
    %603 = vst [vmem:[#allocation7 + $0x110] sm:$0xff] %v288
    %604 = vst [vmem:[#allocation7 + $0x120] sm:$0xff] %v293
    %605 = vst [vmem:[#allocation7 + $0x130] sm:$0xff] %v298
    %606 = vst [vmem:[#allocation7 + $0x140] sm:$0xff] %v303
    %607 = vst [vmem:[#allocation7 + $0x150] sm:$0xff] %v308
    %608 = vst [vmem:[#allocation7 + $0x160] sm:$0xff] %v313
    %609 = vst [vmem:[#allocation7 + $0x170] sm:$0xff] %v318
    %610 = vst [vmem:[#allocation7 + $0x180] sm:$0xff] %v323
    %611 = vst [vmem:[#allocation7 + $0x190] sm:$0xff] %v328
    %612 = vst [vmem:[#allocation7 + $0x1a0] sm:$0xff] %v333
    %613 = vst [vmem:[#allocation7 + $0x1b0] sm:$0xff] %v338
    %614 = vst [vmem:[#allocation7 + $0x1c0] sm:$0xff] %v343
    %615 = vst [vmem:[#allocation7 + $0x1d0] sm:$0xff] %v348
    %616 = vst [vmem:[#allocation7 + $0x1e0] sm:$0xff] %v353
    %617 = vst [vmem:[#allocation7 + $0x1f0] sm:$0xff] %v358
    %618 = vst [vmem:[#allocation7 + $0x8] sm:$0xff] %v428
    %619 = vst [vmem:[#allocation7 + $0x18] sm:$0xff] %v433
    %620 = vst [vmem:[#allocation7 + $0x28] sm:$0xff] %v438
    %621 = vst [vmem:[#allocation7 + $0x38] sm:$0xff] %v443
    %622 = vst [vmem:[#allocation7 + $0x48] sm:$0xff] %v448
    %623 = vst [vmem:[#allocation7 + $0x58] sm:$0xff] %v453
    %624 = vst [vmem:[#allocation7 + $0x68] sm:$0xff] %v458
    %625 = vst [vmem:[#allocation7 + $0x78] sm:$0xff] %v463
    %626 = vst [vmem:[#allocation7 + $0x88] sm:$0xff] %v468
    %627 = vst [vmem:[#allocation7 + $0x98] sm:$0xff] %v473
    %628 = vst [vmem:[#allocation7 + $0xa8] sm:$0xff] %v478
    %629 = vst [vmem:[#allocation7 + $0xb8] sm:$0xff] %v483
    %630 = vst [vmem:[#allocation7 + $0xc8] sm:$0xff] %v488
    %631 = vst [vmem:[#allocation7 + $0xd8] sm:$0xff] %v493
    %632 = vst [vmem:[#allocation7 + $0xe8] sm:$0xff] %v498
    %633 = vst [vmem:[#allocation7 + $0xf8] sm:$0xff] %v503
    %634 = vst [vmem:[#allocation7 + $0x108] sm:$0xff] %v508
    %635 = vst [vmem:[#allocation7 + $0x118] sm:$0xff] %v513
    %636 = vst [vmem:[#allocation7 + $0x128] sm:$0xff] %v518
    %637 = vst [vmem:[#allocation7 + $0x138] sm:$0xff] %v523
    %638 = vst [vmem:[#allocation7 + $0x148] sm:$0xff] %v528
    %639 = vst [vmem:[#allocation7 + $0x158] sm:$0xff] %v533
    %640 = vst [vmem:[#allocation7 + $0x168] sm:$0xff] %v538
    %641 = vst [vmem:[#allocation7 + $0x178] sm:$0xff] %v543
    %642 = vst [vmem:[#allocation7 + $0x188] sm:$0xff] %v548
    %643 = vst [vmem:[#allocation7 + $0x198] sm:$0xff] %v553
    %644 = vst [vmem:[#allocation7 + $0x1a8] sm:$0xff] %v558
    %645 = vst [vmem:[#allocation7 + $0x1b8] sm:$0xff] %v563
    %646 = vst [vmem:[#allocation7 + $0x1c8] sm:$0xff] %v568
    %647 = vst [vmem:[#allocation7 + $0x1d8] sm:$0xff] %v573
    %648 = vst [vmem:[#allocation7 + $0x1e8] sm:$0xff] %v578
    %649 = vst [vmem:[#allocation7 + $0x1f8] sm:$0xff] %v583
    // Predicated region
    $region18: #{gcn_propagate_concat.1} parent=1 // pred_check
      _
    $region19: #{gcn_propagate_concat.1} parent=1 // pred_check_branch
      %651 = sbr.rel (0) target = $region21
    $region20: #{gcn_propagate_concat.1} parent=1 // pred_region
      %s653 = ssub.s32 8192, 8192
      %654 = vsyncadd [#allocation4], %s653
      %s655 = sshll.u32 [#allocation7], 4
      %s656 = int_to_ptr.vmem [resolvable:$true] %s655
      %661 = dma.vmem_to_hbm [thread:$0]  %s656, 8192, %s2, [#allocation4], 256, 256, 16
    $region21: #{gcn_propagate_concat.1} parent=1 // pred_fallthru
      _
    // Predicated region
    $region22: #{gcn_propagate_concat.1} parent=1 // pred_check
      _
    $region23: #{gcn_propagate_concat.1} parent=1 // pred_check_branch
      %663 = sbr.rel (0) target = $region25
    $region24: #{gcn_propagate_concat.1} parent=1 // pred_region
      %664 = dma.done [#allocation4], 8192
    $region25: #{gcn_propagate_concat.1} parent=1 // pred_fallthru
      _
    %665 = vsyncpa [#allocation3], 1
    %666 = vsyncpa [#allocation6], 1
    %667 = vsyncpa [#allocation4], 1

</llo_original>
